<compile_context>
chip_gen: v5e
topology: v5e:2x2
jax: 0.10.0
libtpu: 0.0.40
codegen_flags: <defaults>
</compile_context>

<pallas_src>
import functools

import numpy as np
import jax
import jax.numpy as jnp
from jax import lax
from jax.experimental import pallas as pl
from jax.experimental.pallas import tpu as pltpu


def _largest_divisor_leq(n, cap):
    cap = max(1, min(cap, n))
    for d in range(cap, 0, -1):
        if n % d == 0:
            return d
    return 1


def _pick_time_chunk(n, min_chunk, cap):
    cap = max(1, min(cap, n))
    for d in range(cap, 0, -1):
        if n % d == 0 and d >= min_chunk:
            return d
    return n  # single chunk (always >= min_chunk since min_chunk <= n)


# ----------------------------------------------------------------------------------
# Fused conv_in + GRU input projection: one (T*B, C) @ (C, 3C) matmul, bias folded in.
# ----------------------------------------------------------------------------------
def _input_proj_kernel(x_ref, w_ref, b_ref, o_ref):
    g = jnp.dot(
        x_ref[...].astype(jnp.float32),
        w_ref[...].astype(jnp.float32),
        preferred_element_type=jnp.float32,
    )
    o_ref[...] = (g + b_ref[...].astype(jnp.float32)).astype(o_ref.dtype)


def input_projection(x2, w_in_fused, b_ih):
    M, _ = x2.shape
    G = w_in_fused.shape[1]
    # Single block: M = T*B is tiny (pre-upsample).  For very long T this could be
    # tiled over M with a "parallel" grid, but it is noise next to the upsample.
    return pl.pallas_call(
        _input_proj_kernel,
        out_shape=jax.ShapeDtypeStruct((M, G), jnp.float32),
    )(x2, w_in_fused, b_ih)


# ----------------------------------------------------------------------------------
# GRU recurrence (PyTorch gate order r, z, n).  Input gates already contain
# x @ (W_ih @ W_conv).T + b_ih; inside the loop there is a single fused
# h @ W_hh_cat matmul per step.  h carried in VMEM scratch across T-chunks.
# ----------------------------------------------------------------------------------
def _gru_kernel(gx_ref, whh_ref, bhh_ref, o_ref, h_ref, *, hidden):
    @pl.when(pl.program_id(0) == 0)
    def _():
        h_ref[...] = jnp.zeros_like(h_ref)

    C = hidden
    w_hh = whh_ref[...].astype(jnp.float32)      # hoisted out of the loop
    b_hh = bhh_ref[...].astype(jnp.float32)      # hoisted out of the loop
    t_chunk = gx_ref.shape[0]

    def step(t, h):
        gi = gx_ref[t].astype(jnp.float32)                                   # (B, 3C)
        gh = jnp.dot(h, w_hh, preferred_element_type=jnp.float32) + b_hh     # (B, 3C)
        r = jax.nn.sigmoid(gi[:, 0:C] + gh[:, 0:C])
        z = jax.nn.sigmoid(gi[:, C:2 * C] + gh[:, C:2 * C])
        n = jnp.tanh(gi[:, 2 * C:3 * C] + r * gh[:, 2 * C:3 * C])
        h_new = (1.0 - z) * n + z * h
        o_ref[t] = h_new.astype(o_ref.dtype)
        return h_new

    h_ref[...] = lax.fori_loop(0, t_chunk, step, h_ref[...])


def gru_forward(gx, w_hh, b_hh, *, hidden, t_chunk=None, out_dtype=jnp.float32):
    T, B, G = gx.shape
    if t_chunk is None:
        t_chunk = T
    t_chunk = _largest_divisor_leq(T, t_chunk)
    kern = functools.partial(_gru_kernel, hidden=hidden)
    return pl.pallas_call(
        kern,
        out_shape=jax.ShapeDtypeStruct((T, B, hidden), out_dtype),
        grid=(T // t_chunk,),
        in_specs=[
            pl.BlockSpec((t_chunk, B, G), lambda i: (i, 0, 0)),
            pl.BlockSpec((hidden, G), lambda i: (0, 0)),
            pl.BlockSpec((1, G), lambda i: (0, 0)),
        ],
        out_specs=pl.BlockSpec((t_chunk, B, hidden), lambda i: (i, 0, 0)),
        scratch_shapes=[pltpu.VMEM((B, hidden), jnp.float32)],
        compiler_params=pltpu.CompilerParams(dimension_semantics=("arbitrary",)),
    )(gx, w_hh, b_hh)


# ----------------------------------------------------------------------------------
# Plain-JAX per-stage cascade (Stretch2d nearest + zero-pad + (1, 2s+1) conv) along a
# chosen axis.  Used (a) at trace time on an identity "delta train" to derive the
# exact interior stencil of the fused operator, and (b) on a tiny (<=2D+1)-frame
# prefix/suffix of x to get the exact boundary rows.
# ----------------------------------------------------------------------------------
def _stage_nearest_conv(x, scale, taps, axis):
    x = jnp.repeat(x, scale, axis=axis)
    L = x.shape[axis]
    pad = [(0, 0)] * x.ndim
    pad[axis] = (scale, scale)
    xp = jnp.pad(x, pad)
    out = None
    for k in range(2 * scale + 1):
        term = taps[k].astype(x.dtype) * lax.slice_in_dim(xp, k, k + L, axis=axis)
        out = term if out is None else out + term
    return out


def _cascade(x, scales, taps_list, axis):
    for s, taps in zip(scales, taps_list):
        x = _stage_nearest_conv(x, s, taps, axis)
    return x


def _interior_coeffs(upsample_scales, taps_list):
    """(S, 2D+1) interior stencil: out[S*q + r] = sum_d coef[r, d] * x[q + d - D]."""
    D = len(upsample_scales)
    S = int(np.prod(upsample_scales))
    eye = jnp.eye(2 * D + 1, dtype=jnp.float32)                   # (time, which-delta)
    resp = _cascade(eye, upsample_scales, taps_list, axis=0)       # (S*(2D+1), 2D+1)
    return resp[S * D:S * D + S, :]                                # group q=D is interior


# ----------------------------------------------------------------------------------
# Fully fused upsample cascade.  out[b, q, r, c] = sum_d w[d, r, c] * x_pad[b, q+d, c]
# with exact boundary rows spliced in on the first/last chunk.
# ----------------------------------------------------------------------------------
def _fused_upsample_kernel(x_ref, w_ref, lfix_ref, rfix_ref, o_ref, *,
                           t_chunk, n_taps, d_fix):
    i = pl.program_id(1)
    start = pl.multiple_of(i * t_chunk, t_chunk)

    acc = None
    for d in range(n_taps):                                   # n_taps = 2D+1, static
        xd = x_ref[pl.ds(start + d, t_chunk), :].astype(jnp.float32)   # (tc, C)
        term = xd[:, None, :] * w_ref[d].astype(jnp.float32)            # (tc, S, C)
        acc = term if acc is None else acc + term
    o_ref[...] = acc.astype(o_ref.dtype)

    @pl.when(i == 0)
    def _():
        o_ref[0:d_fix] = lfix_ref[...].astype(o_ref.dtype)

    @pl.when(i == pl.num_programs(1) - 1)
    def _():
        o_ref[t_chunk - d_fix:t_chunk] = rfix_ref[...].astype(o_ref.dtype)


def fused_upsample(x, upsample_scales, taps_list, *, max_chunk=256):
    """x: (B, T, C) -> (B, T*prod(scales), C), exact module semantics."""
    B, T, C = x.shape
    D = len(upsample_scales)
    K = 2 * D + 1
    S = int(np.prod(upsample_scales))
    out_dtype = x.dtype

    # Interior stencil coefficients, broadcast over channels: w[d, r, c] = coef[r, d].
    coef = _interior_coeffs(upsample_scales, taps_list)                     # (S, K)
    w = jnp.broadcast_to(jnp.transpose(coef)[:, :, None], (K, S, C)).astype(jnp.float32)

    # Exact boundary groups (first / last min(D, T)) from a tiny per-stage cascade.
    d_fix = min(D, T)
    P = min(T, K)
    lfix = _cascade(x[:, :P, :], upsample_scales, taps_list, axis=1)[:, :d_fix * S, :]
    rfix = _cascade(x[:, T - P:, :], upsample_scales, taps_list, axis=1)[:, -(d_fix * S):, :]
    lfix = lfix.reshape(B, d_fix, S, C).astype(out_dtype)
    rfix = rfix.reshape(B, d_fix, S, C).astype(out_dtype)

    x_pad = jnp.pad(x, ((0, 0), (D, D), (0, 0)))                            # (B, T+2D, C)

    t_chunk = _pick_time_chunk(T, d_fix, max_chunk)
    n_chunks = T // t_chunk

    kern = functools.partial(_fused_upsample_kernel,
                             t_chunk=t_chunk, n_taps=K, d_fix=d_fix)
    out4 = pl.pallas_call(
        kern,
        out_shape=jax.ShapeDtypeStruct((B, T, S, C), out_dtype),
        grid=(B, n_chunks),
        in_specs=[
            pl.BlockSpec((None, T + 2 * D, C), lambda b, i: (b, 0, 0)),      # per-batch resident
            pl.BlockSpec((K, S, C), lambda b, i: (0, 0, 0)),                 # resident coeffs
            pl.BlockSpec((None, d_fix, S, C), lambda b, i: (b, 0, 0, 0)),    # left boundary fix
            pl.BlockSpec((None, d_fix, S, C), lambda b, i: (b, 0, 0, 0)),    # right boundary fix
        ],
        out_specs=pl.BlockSpec((None, t_chunk, S, C), lambda b, i: (b, i, 0, 0)),
        compiler_params=pltpu.CompilerParams(
            dimension_semantics=("parallel", "parallel")),
    )(x_pad, w, lfix, rfix)

    # Row-major relabeling (B, T, S, C) -> (B, T*S, C): free (bitcast) under jit.
    # TODO(synk): for C < 128 a lane-merged (B, T, S*C) output block would give
    # fully unmasked vector stores; left as-is to keep lowering simple and safe.
    return out4.reshape(B, T * S, C)


# ----------------------------------------------------------------------------------
# Full ConvInUpsampleNetwork forward (cin_pad=0, freq_axis_kernel_size=1,
# upsample_activation='none', use_gru=True, mode='nearest')
# ----------------------------------------------------------------------------------
def conv_in_upsample_forward(c, params, upsample_scales, taps_list, *,
                             gru_t_chunk=None, up_max_chunk=256,
                             act_dtype=jnp.float32):
    B, C, T = c.shape

    # conv_in folded into the GRU input projection -> one big matmul for all t.
    # TODO(synk): for very small total upsample factors, fold this projection into
    # the GRU kernel to avoid the (T, B, 3C) HBM round trip (negligible otherwise).
    x2 = jnp.transpose(c, (2, 0, 1)).reshape(T * B, C)
    gx = input_projection(x2, params["w_in_fused"], params["b_ih"]).reshape(T, B, 3 * C)

    # GRU recurrence, T-chunked, h carried in VMEM scratch, time-major output.
    h = gru_forward(gx, params["w_hh"], params["b_hh"], hidden=C,
                    t_chunk=gru_t_chunk, out_dtype=act_dtype)                # (T, B, C)

    # Tiny relayout (1/prod(scales) of output traffic) before the fused upsample.
    x_btc = jnp.transpose(h, (1, 0, 2)).astype(jnp.float32)                  # (B, T, C)

    # Single fused kernel for the whole upsample cascade, output already (B, T_up, C).
    return fused_upsample(x_btc, upsample_scales, taps_list, max_chunk=up_max_chunk)


# ----------------------------------------------------------------------------------
# Pure-JAX reference mirroring the PyTorch semantics (conv -> GRU -> stretch/pad/conv)
# ----------------------------------------------------------------------------------
def reference_forward(c, w_conv, W_ih, W_hh, b_ih, b_hh, upsample_scales, taps_list):
    B, C, T = c.shape
    c = jnp.einsum("oc,bct->bot", w_conv, c)
    x = jnp.transpose(c, (2, 0, 1))                               # (T, B, C)

    def step(h, x_t):
        gi = x_t @ W_ih.T + b_ih
        gh = h @ W_hh.T + b_hh
        i_r, i_z, i_n = jnp.split(gi, 3, axis=-1)
        h_r, h_z, h_n = jnp.split(gh, 3, axis=-1)
        r = jax.nn.sigmoid(i_r + h_r)
        z = jax.nn.sigmoid(i_z + h_z)
        n = jnp.tanh(i_n + r * h_n)
        h_new = (1.0 - z) * n + z * h
        return h_new, h_new

    h0 = jnp.zeros((B, C), jnp.float32)
    _, hs = lax.scan(step, h0, x)
    cc = jnp.transpose(hs, (1, 2, 0))                             # (B, C, T)

    for s, taps in zip(upsample_scales, taps_list):
        cc = jnp.repeat(cc, s, axis=-1)
        t_out = cc.shape[-1]
        cp = jnp.pad(cc, ((0, 0), (0, 0), (s, s)))
        cc = sum(taps[k] * cp[:, :, k:k + t_out] for k in range(2 * s + 1))
    return jnp.transpose(cc, (0, 2, 1))                           # (B, T_up, C)


# ----------------------------------------------------------------------------------
if __name__ == "__main__":
    B, C, T = 2, 32, 8                      # batch, cin_channels, input frames
    upsample_scales = (4, 4)                # total upsampling factor 16

    key = jax.random.PRNGKey(0)
    k_in, k_wih, k_whh, k_bih, k_bhh, k_x = jax.random.split(key, 6)

    # Deterministic synthetic parameters.
    w_conv_in = jax.random.normal(k_in, (C, C), jnp.float32) * (1.0 / jnp.sqrt(C))
    W_ih = jax.random.normal(k_wih, (3 * C, C), jnp.float32) * 0.1
    W_hh = jax.random.normal(k_whh, (3 * C, C), jnp.float32) * 0.1
    b_ih = jax.random.normal(k_bih, (3 * C,), jnp.float32) * 0.1
    b_hh = jax.random.normal(k_bhh, (3 * C,), jnp.float32) * 0.1

    # Module-at-init upsample taps: uniform 1/(2s+1) (weight_norm is identity at init).
    # The kernel derives its stencil from the actual taps, so trained taps work too.
    taps_list = [jnp.full((2 * s + 1,), 1.0 / (2 * s + 1), jnp.float32)
                 for s in upsample_scales]

    params = {
        "w_in_fused": (W_ih @ w_conv_in).T,        # conv_in folded into W_ih (exact)
        "b_ih": b_ih.reshape(1, 3 * C),
        "w_hh": W_hh.T,                            # fused (C, 3C) hidden weights
        "b_hh": b_hh.reshape(1, 3 * C),
    }

    c = jax.random.normal(k_x, (B, C, T), jnp.float32)

    fwd = jax.jit(lambda c_, p_, t_: conv_in_upsample_forward(
        c_, p_, upsample_scales, t_, gru_t_chunk=4, up_max_chunk=4))
    out = jax.block_until_ready(fwd(c, params, taps_list))

    ref = reference_forward(c, w_conv_in, W_ih, W_hh, b_ih, b_hh,
                            upsample_scales, taps_list)
    ref = jax.block_until_ready(ref)

    total = 1
    for s in upsample_scales:
        total *= s
    assert out.shape == (B, T * total, C), out.shape
    max_err = float(jnp.max(jnp.abs(out - ref)))
    assert jnp.allclose(out, ref, atol=1e-2, rtol=1e-2), max_err

    print("KERNEL_OK")
</pallas_src>

<mosaic_0001>
module attributes {stable_mosaic.version = 11 : i64} {
  func.func @_gru_kernel(%arg0: i32, %arg1: memref<4x2x96xf32, #tpu.memory_space<vmem>>, %arg2: memref<32x96xf32, #tpu.memory_space<vmem>>, %arg3: memref<1x96xf32, #tpu.memory_space<vmem>>, %arg4: memref<4x2x32xf32, #tpu.memory_space<vmem>>, %arg5: memref<2x32xf32, #tpu.memory_space<vmem>>) attributes {dimension_semantics = [#tpu.dimension_semantics<arbitrary>], iteration_bounds = array<i64: 2>, scalar_prefetch = 0 : i64, scratch_operands = 1 : i64, tpu.core_type = #tpu.core_type<tc>, window_params = [{transform_indices = @transform_0, window_bounds = array<i64: 4, 2, 96>}, {pipeline_mode = #tpu.pipeline_mode<synchronous>, transform_indices = @transform_1, window_bounds = array<i64: 32, 96>}, {pipeline_mode = #tpu.pipeline_mode<synchronous>, transform_indices = @transform_2, window_bounds = array<i64: 1, 96>}, {transform_indices = @transform_3, window_bounds = array<i64: 4, 2, 32>}]} {
    %c0_i32 = arith.constant 0 : i32
    %0 = arith.cmpi eq, %arg0, %c0_i32 : i32
    %1 = arith.extui %0 : i1 to i32
    %c0_i32_0 = arith.constant 0 : i32
    %2 = arith.cmpi ne, %1, %c0_i32_0 : i32
    scf.if %2 {
      %cst = arith.constant 0.000000e+00 : f32
      %9 = vector.broadcast %cst : f32 to vector<2x32xf32>
      %c0_10 = arith.constant 0 : index
      %c0_11 = arith.constant 0 : index
      %10 = vector.load %arg5[%c0_10, %c0_11] : memref<2x32xf32, #tpu.memory_space<vmem>>, vector<2x32xf32>
      tpu.vector_store %arg5[%c0_10, %c0_11], %9 {strides = array<i32>} : memref<2x32xf32, #tpu.memory_space<vmem>>, vector<2x32xf32>,
    } else {
    }
    %c0 = arith.constant 0 : index
    %c0_1 = arith.constant 0 : index
    %3 = vector.load %arg2[%c0, %c0_1] : memref<32x96xf32, #tpu.memory_space<vmem>>, vector<32x96xf32>
    %c0_2 = arith.constant 0 : index
    %c0_3 = arith.constant 0 : index
    %4 = vector.load %arg3[%c0_2, %c0_3] : memref<1x96xf32, #tpu.memory_space<vmem>>, vector<1x96xf32>
    %c0_4 = arith.constant 0 : index
    %c0_5 = arith.constant 0 : index
    %5 = vector.load %arg5[%c0_4, %c0_5] : memref<2x32xf32, #tpu.memory_space<vmem>>, vector<2x32xf32>
    %c0_i32_6 = arith.constant 0 : i32
    %c4_i32 = arith.constant 4 : i32
    %6 = arith.addi %c0_i32_6, %c4_i32 : i32
    %c1_i32 = arith.constant 1 : i32
    %7 = scf.for %arg6 = %c0_i32_6 to %6 step %c1_i32 iter_args(%arg7 = %5) -> (vector<2x32xf32>)  : i32 {
      %9 = arith.index_cast %arg6 : i32 to index
      %c0_10 = arith.constant 0 : index
      %c0_11 = arith.constant 0 : index
      %10 = vector.load %arg1[%9, %c0_10, %c0_11] : memref<4x2x96xf32, #tpu.memory_space<vmem>>, vector<1x2x96xf32>
      %11 = vector.shape_cast %10 : vector<1x2x96xf32> to vector<2x96xf32>
      %cst = arith.constant dense<0.000000e+00> : vector<2x96xf32>
      %12 = tpu.matmul %arg7, %3, %cst {dimension_numbers = #tpu.dot_dimension_numbers<[1], [0], [0], [1], [0, 0, 1, 1], [], []>} : vector<2x32xf32>, vector<32x96xf32>, vector<2x96xf32> -> vector<2x96xf32>
      %13 = vector.broadcast %4 : vector<1x96xf32> to vector<2x96xf32>
      %14 = arith.addf %12, %13 : vector<2x96xf32>
      %15 = vector.extract_strided_slice %11 {offsets = [0, 0], sizes = [2, 32], strides = [1, 1]} : vector<2x96xf32> to vector<2x32xf32>
      %16 = vector.extract_strided_slice %14 {offsets = [0, 0], sizes = [2, 32], strides = [1, 1]} : vector<2x96xf32> to vector<2x32xf32>
      %17 = arith.addf %15, %16 : vector<2x32xf32>
      %18 = arith.negf %17 : vector<2x32xf32>
      %19 = math.exp %18 : vector<2x32xf32>
      %cst_12 = arith.constant 1.000000e+00 : f32
      %20 = vector.broadcast %cst_12 : f32 to vector<2x32xf32>
      %21 = arith.addf %20, %19 : vector<2x32xf32>
      %22 = arith.divf %20, %21 : vector<2x32xf32>
      %23 = vector.extract_strided_slice %11 {offsets = [0, 32], sizes = [2, 32], strides = [1, 1]} : vector<2x96xf32> to vector<2x32xf32>
      %24 = vector.extract_strided_slice %14 {offsets = [0, 32], sizes = [2, 32], strides = [1, 1]} : vector<2x96xf32> to vector<2x32xf32>
      %25 = arith.addf %23, %24 : vector<2x32xf32>
      %26 = arith.negf %25 : vector<2x32xf32>
      %27 = math.exp %26 : vector<2x32xf32>
      %cst_13 = arith.constant 1.000000e+00 : f32
      %28 = vector.broadcast %cst_13 : f32 to vector<2x32xf32>
      %29 = arith.addf %28, %27 : vector<2x32xf32>
      %30 = arith.divf %28, %29 : vector<2x32xf32>
      %31 = vector.extract_strided_slice %11 {offsets = [0, 64], sizes = [2, 32], strides = [1, 1]} : vector<2x96xf32> to vector<2x32xf32>
      %32 = vector.extract_strided_slice %14 {offsets = [0, 64], sizes = [2, 32], strides = [1, 1]} : vector<2x96xf32> to vector<2x32xf32>
      %33 = arith.mulf %22, %32 : vector<2x32xf32>
      %34 = arith.addf %31, %33 : vector<2x32xf32>
      %35 = math.tanh %34 : vector<2x32xf32>
      %cst_14 = arith.constant 1.000000e+00 : f32
      %36 = vector.broadcast %cst_14 : f32 to vector<2x32xf32>
      %37 = arith.subf %36, %30 : vector<2x32xf32>
      %38 = arith.mulf %37, %35 : vector<2x32xf32>
      %39 = arith.mulf %30, %arg7 : vector<2x32xf32>
      %40 = arith.addf %38, %39 : vector<2x32xf32>
      %41 = arith.index_cast %arg6 : i32 to index
      %c0_15 = arith.constant 0 : index
      %c0_16 = arith.constant 0 : index
      %42 = vector.load %arg4[%41, %c0_15, %c0_16] : memref<4x2x32xf32, #tpu.memory_space<vmem>>, vector<1x2x32xf32>
      %43 = vector.shape_cast %42 : vector<1x2x32xf32> to vector<2x32xf32>
      %44 = vector.shape_cast %40 : vector<2x32xf32> to vector<1x2x32xf32>
      tpu.vector_store %arg4[%41, %c0_15, %c0_16], %44 {strides = array<i32>} : memref<4x2x32xf32, #tpu.memory_space<vmem>>, vector<1x2x32xf32>,
      scf.yield %40 : vector<2x32xf32>
    }
    %c4_i32_7 = arith.constant 4 : i32
    %c0_8 = arith.constant 0 : index
    %c0_9 = arith.constant 0 : index
    %8 = vector.load %arg5[%c0_8, %c0_9] : memref<2x32xf32, #tpu.memory_space<vmem>>, vector<2x32xf32>
    tpu.vector_store %arg5[%c0_8, %c0_9], %7 {strides = array<i32>} : memref<2x32xf32, #tpu.memory_space<vmem>>, vector<2x32xf32>,
    return
  }
  func.func @transform_0(%arg0: i32) -> (i32, i32, i32) {
    %c0_i32 = arith.constant 0 : i32
    %c0_i32_0 = arith.constant 0 : i32
    %c0_i32_1 = arith.constant 0 : i32
    return %arg0, %c0_i32, %c0_i32_0 : i32, i32, i32
  }
  func.func @transform_1(%arg0: i32) -> (i32, i32) {
    %c0_i32 = arith.constant 0 : i32
    %c0_i32_0 = arith.constant 0 : i32
    %c0_i32_1 = arith.constant 0 : i32
    return %c0_i32, %c0_i32_0 : i32, i32
  }
  func.func @transform_2(%arg0: i32) -> (i32, i32) {
    %c0_i32 = arith.constant 0 : i32
    %c0_i32_0 = arith.constant 0 : i32
    %c0_i32_1 = arith.constant 0 : i32
    return %c0_i32, %c0_i32_0 : i32, i32
  }
  func.func @transform_3(%arg0: i32) -> (i32, i32, i32) {
    %c0_i32 = arith.constant 0 : i32
    %c0_i32_0 = arith.constant 0 : i32
    %c0_i32_1 = arith.constant 0 : i32
    return %arg0, %c0_i32, %c0_i32_0 : i32, i32, i32
  }
}

module attributes {stable_mosaic.version = 11 : i64} {
  func.func @_input_proj_kernel(%arg0: memref<16x32xf32, #tpu.memory_space<vmem>>, %arg1: memref<32x96xf32, #tpu.memory_space<vmem>>, %arg2: memref<1x96xf32, #tpu.memory_space<vmem>>, %arg3: memref<16x96xf32, #tpu.memory_space<vmem>>) attributes {dimension_semantics = [], scalar_prefetch = 0 : i64, scratch_operands = 0 : i64, tpu.core_type = #tpu.core_type<tc>} {
    %c0 = arith.constant 0 : index
    %c0_0 = arith.constant 0 : index
    %0 = vector.load %arg0[%c0, %c0_0] : memref<16x32xf32, #tpu.memory_space<vmem>>, vector<16x32xf32>
    %c0_1 = arith.constant 0 : index
    %c0_2 = arith.constant 0 : index
    %1 = vector.load %arg1[%c0_1, %c0_2] : memref<32x96xf32, #tpu.memory_space<vmem>>, vector<32x96xf32>
    %cst = arith.constant dense<0.000000e+00> : vector<16x96xf32>
    %2 = tpu.matmul %0, %1, %cst {dimension_numbers = #tpu.dot_dimension_numbers<[1], [0], [0], [1], [0, 0, 1, 1], [], []>} : vector<16x32xf32>, vector<32x96xf32>, vector<16x96xf32> -> vector<16x96xf32>
    %c0_3 = arith.constant 0 : index
    %c0_4 = arith.constant 0 : index
    %3 = vector.load %arg2[%c0_3, %c0_4] : memref<1x96xf32, #tpu.memory_space<vmem>>, vector<1x96xf32>
    %4 = vector.broadcast %3 : vector<1x96xf32> to vector<16x96xf32>
    %5 = arith.addf %2, %4 : vector<16x96xf32>
    %c0_5 = arith.constant 0 : index
    %c0_6 = arith.constant 0 : index
    %6 = vector.load %arg3[%c0_5, %c0_6] : memref<16x96xf32, #tpu.memory_space<vmem>>, vector<16x96xf32>
    tpu.vector_store %arg3[%c0_5, %c0_6], %5 {strides = array<i32>} : memref<16x96xf32, #tpu.memory_space<vmem>>, vector<16x96xf32>,
    return
  }
}

module attributes {stable_mosaic.version = 11 : i64} {
  func.func @_fused_upsample_kernel(%arg0: i32, %arg1: i32, %arg2: memref<1x12x32xf32, #tpu.memory_space<vmem>>, %arg3: memref<5x16x32xf32, #tpu.memory_space<vmem>>, %arg4: memref<1x2x16x32xf32, #tpu.memory_space<vmem>>, %arg5: memref<1x2x16x32xf32, #tpu.memory_space<vmem>>, %arg6: memref<1x4x16x32xf32, #tpu.memory_space<vmem>>) attributes {dimension_semantics = [#tpu.dimension_semantics<parallel>, #tpu.dimension_semantics<parallel>], iteration_bounds = array<i64: 2, 2>, scalar_prefetch = 0 : i64, scratch_operands = 0 : i64, tpu.core_type = #tpu.core_type<tc>, window_params = [{transform_indices = @transform_0, window_bounds = array<i64: 1, 12, 32>}, {pipeline_mode = #tpu.pipeline_mode<synchronous>, transform_indices = @transform_1, window_bounds = array<i64: 5, 16, 32>}, {transform_indices = @transform_2, window_bounds = array<i64: 1, 2, 16, 32>}, {transform_indices = @transform_3, window_bounds = array<i64: 1, 2, 16, 32>}, {transform_indices = @transform_4, window_bounds = array<i64: 1, 4, 16, 32>}]} {
    %c4_i32 = arith.constant 4 : i32
    %0 = arith.muli %arg1, %c4_i32 : i32
    %1 = tpu.assume_multiple %0, 4 : i32
    %c0_i32 = arith.constant 0 : i32
    %2 = arith.addi %1, %c0_i32 : i32
    %c0 = arith.constant 0 : index
    %3 = arith.index_cast %2 : i32 to index
    %c0_0 = arith.constant 0 : index
    %4 = vector.load %arg2[%c0, %3, %c0_0] : memref<1x12x32xf32, #tpu.memory_space<vmem>>, vector<1x4x32xf32>
    %5 = vector.shape_cast %4 : vector<1x4x32xf32> to vector<4x32xf32>
    %6 = vector.shape_cast %5 : vector<4x32xf32> to vector<4x1x32xf32>
    %c0_1 = arith.constant 0 : index
    %c0_2 = arith.constant 0 : index
    %c0_3 = arith.constant 0 : index
    %7 = vector.load %arg3[%c0_1, %c0_2, %c0_3] : memref<5x16x32xf32, #tpu.memory_space<vmem>>, vector<1x16x32xf32>
    %8 = vector.shape_cast %7 : vector<1x16x32xf32> to vector<16x32xf32>
    %9 = vector.shape_cast %8 : vector<16x32xf32> to vector<1x16x32xf32>
    %10 = vector.broadcast %6 : vector<4x1x32xf32> to vector<4x16x32xf32>
    %11 = vector.broadcast %9 : vector<1x16x32xf32> to vector<4x16x32xf32>
    %12 = arith.mulf %10, %11 : vector<4x16x32xf32>
    %c1_i32 = arith.constant 1 : i32
    %13 = arith.addi %1, %c1_i32 : i32
    %c0_4 = arith.constant 0 : index
    %14 = arith.index_cast %13 : i32 to index
    %c0_5 = arith.constant 0 : index
    %15 = vector.load %arg2[%c0_4, %14, %c0_5] : memref<1x12x32xf32, #tpu.memory_space<vmem>>, vector<1x4x32xf32>
    %16 = vector.shape_cast %15 : vector<1x4x32xf32> to vector<4x32xf32>
    %17 = vector.shape_cast %16 : vector<4x32xf32> to vector<4x1x32xf32>
    %c1 = arith.constant 1 : index
    %c0_6 = arith.constant 0 : index
    %c0_7 = arith.constant 0 : index
    %18 = vector.load %arg3[%c1, %c0_6, %c0_7] : memref<5x16x32xf32, #tpu.memory_space<vmem>>, vector<1x16x32xf32>
    %19 = vector.shape_cast %18 : vector<1x16x32xf32> to vector<16x32xf32>
    %20 = vector.shape_cast %19 : vector<16x32xf32> to vector<1x16x32xf32>
    %21 = vector.broadcast %17 : vector<4x1x32xf32> to vector<4x16x32xf32>
    %22 = vector.broadcast %20 : vector<1x16x32xf32> to vector<4x16x32xf32>
    %23 = arith.mulf %21, %22 : vector<4x16x32xf32>
    %24 = arith.addf %12, %23 : vector<4x16x32xf32>
    %c2_i32 = arith.constant 2 : i32
    %25 = arith.addi %1, %c2_i32 : i32
    %c0_8 = arith.constant 0 : index
    %26 = arith.index_cast %25 : i32 to index
    %c0_9 = arith.constant 0 : index
    %27 = vector.load %arg2[%c0_8, %26, %c0_9] : memref<1x12x32xf32, #tpu.memory_space<vmem>>, vector<1x4x32xf32>
    %28 = vector.shape_cast %27 : vector<1x4x32xf32> to vector<4x32xf32>
    %29 = vector.shape_cast %28 : vector<4x32xf32> to vector<4x1x32xf32>
    %c2 = arith.constant 2 : index
    %c0_10 = arith.constant 0 : index
    %c0_11 = arith.constant 0 : index
    %30 = vector.load %arg3[%c2, %c0_10, %c0_11] : memref<5x16x32xf32, #tpu.memory_space<vmem>>, vector<1x16x32xf32>
    %31 = vector.shape_cast %30 : vector<1x16x32xf32> to vector<16x32xf32>
    %32 = vector.shape_cast %31 : vector<16x32xf32> to vector<1x16x32xf32>
    %33 = vector.broadcast %29 : vector<4x1x32xf32> to vector<4x16x32xf32>
    %34 = vector.broadcast %32 : vector<1x16x32xf32> to vector<4x16x32xf32>
    %35 = arith.mulf %33, %34 : vector<4x16x32xf32>
    %36 = arith.addf %24, %35 : vector<4x16x32xf32>
    %c3_i32 = arith.constant 3 : i32
    %37 = arith.addi %1, %c3_i32 : i32
    %c0_12 = arith.constant 0 : index
    %38 = arith.index_cast %37 : i32 to index
    %c0_13 = arith.constant 0 : index
    %39 = vector.load %arg2[%c0_12, %38, %c0_13] : memref<1x12x32xf32, #tpu.memory_space<vmem>>, vector<1x4x32xf32>
    %40 = vector.shape_cast %39 : vector<1x4x32xf32> to vector<4x32xf32>
    %41 = vector.shape_cast %40 : vector<4x32xf32> to vector<4x1x32xf32>
    %c3 = arith.constant 3 : index
    %c0_14 = arith.constant 0 : index
    %c0_15 = arith.constant 0 : index
    %42 = vector.load %arg3[%c3, %c0_14, %c0_15] : memref<5x16x32xf32, #tpu.memory_space<vmem>>, vector<1x16x32xf32>
    %43 = vector.shape_cast %42 : vector<1x16x32xf32> to vector<16x32xf32>
    %44 = vector.shape_cast %43 : vector<16x32xf32> to vector<1x16x32xf32>
    %45 = vector.broadcast %41 : vector<4x1x32xf32> to vector<4x16x32xf32>
    %46 = vector.broadcast %44 : vector<1x16x32xf32> to vector<4x16x32xf32>
    %47 = arith.mulf %45, %46 : vector<4x16x32xf32>
    %48 = arith.addf %36, %47 : vector<4x16x32xf32>
    %c4_i32_16 = arith.constant 4 : i32
    %49 = arith.addi %1, %c4_i32_16 : i32
    %c0_17 = arith.constant 0 : index
    %50 = arith.index_cast %49 : i32 to index
    %c0_18 = arith.constant 0 : index
    %51 = vector.load %arg2[%c0_17, %50, %c0_18] : memref<1x12x32xf32, #tpu.memory_space<vmem>>, vector<1x4x32xf32>
    %52 = vector.shape_cast %51 : vector<1x4x32xf32> to vector<4x32xf32>
    %53 = vector.shape_cast %52 : vector<4x32xf32> to vector<4x1x32xf32>
    %c4 = arith.constant 4 : index
    %c0_19 = arith.constant 0 : index
    %c0_20 = arith.constant 0 : index
    %54 = vector.load %arg3[%c4, %c0_19, %c0_20] : memref<5x16x32xf32, #tpu.memory_space<vmem>>, vector<1x16x32xf32>
    %55 = vector.shape_cast %54 : vector<1x16x32xf32> to vector<16x32xf32>
    %56 = vector.shape_cast %55 : vector<16x32xf32> to vector<1x16x32xf32>
    %57 = vector.broadcast %53 : vector<4x1x32xf32> to vector<4x16x32xf32>
    %58 = vector.broadcast %56 : vector<1x16x32xf32> to vector<4x16x32xf32>
    %59 = arith.mulf %57, %58 : vector<4x16x32xf32>
    %60 = arith.addf %48, %59 : vector<4x16x32xf32>
    %c0_21 = arith.constant 0 : index
    %c0_22 = arith.constant 0 : index
    %c0_23 = arith.constant 0 : index
    %c0_24 = arith.constant 0 : index
    %61 = vector.load %arg6[%c0_21, %c0_22, %c0_23, %c0_24] : memref<1x4x16x32xf32, #tpu.memory_space<vmem>>, vector<1x4x16x32xf32>
    %62 = vector.shape_cast %61 : vector<1x4x16x32xf32> to vector<4x16x32xf32>
    %63 = vector.shape_cast %60 : vector<4x16x32xf32> to vector<1x4x16x32xf32>
    tpu.vector_store %arg6[%c0_21, %c0_22, %c0_23, %c0_24], %63 {strides = array<i32>} : memref<1x4x16x32xf32, #tpu.memory_space<vmem>>, vector<1x4x16x32xf32>,
    %c0_i32_25 = arith.constant 0 : i32
    %64 = arith.cmpi eq, %arg1, %c0_i32_25 : i32
    %65 = arith.extui %64 : i1 to i32
    %c0_i32_26 = arith.constant 0 : i32
    %66 = arith.cmpi ne, %65, %c0_i32_26 : i32
    scf.if %66 {
      %c0_29 = arith.constant 0 : index
      %c0_30 = arith.constant 0 : index
      %c0_31 = arith.constant 0 : index
      %c0_32 = arith.constant 0 : index
      %70 = vector.load %arg4[%c0_29, %c0_30, %c0_31, %c0_32] : memref<1x2x16x32xf32, #tpu.memory_space<vmem>>, vector<1x2x16x32xf32>
      %71 = vector.shape_cast %70 : vector<1x2x16x32xf32> to vector<2x16x32xf32>
      %c0_33 = arith.constant 0 : index
      %c0_34 = arith.constant 0 : index
      %c0_35 = arith.constant 0 : index
      %c0_36 = arith.constant 0 : index
      %72 = vector.load %arg6[%c0_33, %c0_34, %c0_35, %c0_36] : memref<1x4x16x32xf32, #tpu.memory_space<vmem>>, vector<1x2x16x32xf32>
      %73 = vector.shape_cast %72 : vector<1x2x16x32xf32> to vector<2x16x32xf32>
      %74 = vector.shape_cast %71 : vector<2x16x32xf32> to vector<1x2x16x32xf32>
      tpu.vector_store %arg6[%c0_33, %c0_34, %c0_35, %c0_36], %74 {strides = array<i32>} : memref<1x4x16x32xf32, #tpu.memory_space<vmem>>, vector<1x2x16x32xf32>,
    } else {
    }
    %c1_i32_27 = arith.constant 1 : i32
    %67 = arith.cmpi eq, %arg1, %c1_i32_27 : i32
    %68 = arith.extui %67 : i1 to i32
    %c0_i32_28 = arith.constant 0 : i32
    %69 = arith.cmpi ne, %68, %c0_i32_28 : i32
    scf.if %69 {
      %c0_29 = arith.constant 0 : index
      %c0_30 = arith.constant 0 : index
      %c0_31 = arith.constant 0 : index
      %c0_32 = arith.constant 0 : index
      %70 = vector.load %arg5[%c0_29, %c0_30, %c0_31, %c0_32] : memref<1x2x16x32xf32, #tpu.memory_space<vmem>>, vector<1x2x16x32xf32>
      %71 = vector.shape_cast %70 : vector<1x2x16x32xf32> to vector<2x16x32xf32>
      %c0_33 = arith.constant 0 : index
      %c2_34 = arith.constant 2 : index
      %c0_35 = arith.constant 0 : index
      %c0_36 = arith.constant 0 : index
      %72 = vector.load %arg6[%c0_33, %c2_34, %c0_35, %c0_36] : memref<1x4x16x32xf32, #tpu.memory_space<vmem>>, vector<1x2x16x32xf32>
      %73 = vector.shape_cast %72 : vector<1x2x16x32xf32> to vector<2x16x32xf32>
      %74 = vector.shape_cast %71 : vector<2x16x32xf32> to vector<1x2x16x32xf32>
      tpu.vector_store %arg6[%c0_33, %c2_34, %c0_35, %c0_36], %74 {strides = array<i32>} : memref<1x4x16x32xf32, #tpu.memory_space<vmem>>, vector<1x2x16x32xf32>,
    } else {
    }
    return
  }
  func.func @transform_0(%arg0: i32, %arg1: i32) -> (i32, i32, i32) {
    %c0_i32 = arith.constant 0 : i32
    %c0_i32_0 = arith.constant 0 : i32
    %c0_i32_1 = arith.constant 0 : i32
    return %arg0, %c0_i32, %c0_i32_0 : i32, i32, i32
  }
  func.func @transform_1(%arg0: i32, %arg1: i32) -> (i32, i32, i32) {
    %c0_i32 = arith.constant 0 : i32
    %c0_i32_0 = arith.constant 0 : i32
    %c0_i32_1 = arith.constant 0 : i32
    %c0_i32_2 = arith.constant 0 : i32
    return %c0_i32, %c0_i32_0, %c0_i32_1 : i32, i32, i32
  }
  func.func @transform_2(%arg0: i32, %arg1: i32) -> (i32, i32, i32, i32) {
    %c0_i32 = arith.constant 0 : i32
    %c0_i32_0 = arith.constant 0 : i32
    %c0_i32_1 = arith.constant 0 : i32
    %c0_i32_2 = arith.constant 0 : i32
    return %arg0, %c0_i32, %c0_i32_0, %c0_i32_1 : i32, i32, i32, i32
  }
  func.func @transform_3(%arg0: i32, %arg1: i32) -> (i32, i32, i32, i32) {
    %c0_i32 = arith.constant 0 : i32
    %c0_i32_0 = arith.constant 0 : i32
    %c0_i32_1 = arith.constant 0 : i32
    %c0_i32_2 = arith.constant 0 : i32
    return %arg0, %c0_i32, %c0_i32_0, %c0_i32_1 : i32, i32, i32, i32
  }
  func.func @transform_4(%arg0: i32, %arg1: i32) -> (i32, i32, i32, i32) {
    %c0_i32 = arith.constant 0 : i32
    %c0_i32_0 = arith.constant 0 : i32
    %c0_i32_1 = arith.constant 0 : i32
    return %arg0, %arg1, %c0_i32, %c0_i32_0 : i32, i32, i32, i32
  }
}

</mosaic_0001>

<llo_original>
// kernel: _lambda_.3
$region0: #{_lambda_.3}
  #allocation0 [shape = 'u32[]', space=smem, size = 0x4, offset = 0x4, fixed_abs, tag = 'smem constant byte address 0x4 - core index']
  #allocation1 [shape = 'u32[72,128]{1,0:T(1,128)}', space=vmem, size = 0x9000, scoped, tag = 'internal scratch']
  %s0 = inlined_call_operand.vmem [shape: f32[16,32], index: 0, kind: input, shape index: {}]
  %s1 = inlined_call_operand.vmem [shape: f32[32,96], index: 1, kind: input, shape index: {}]
  %s2 = inlined_call_operand.vmem [shape: f32[1,96], index: 2, kind: input, shape index: {}]
  %s3 = inlined_call_operand.vmem [shape: f32[16,96], index: 3, kind: output, shape index: {}]
  %s4 = sld [smem:[#allocation0]]
  $region22: #{_lambda_.3} parent=0
    _
  %s6 = ssub.s32 1, %s4
  %s7 = scalar_select 0, %s6, %s4
  // Predicated region
  $region2: #{_lambda_.3} parent=0 // pred_check
    _
  $region3: #{_lambda_.3} parent=0 // pred_check_branch
    %9 = sbr.rel (0) target = $region5
  $region4: #{_lambda_.3} parent=0 // pred_region
    _
  $region5: #{_lambda_.3} parent=0 // pred_fallthru
    _
  // Predicated region
  $region6: #{_lambda_.3} parent=0 // pred_check
    _
  $region7: #{_lambda_.3} parent=0 // pred_check_branch
    %11 = sbr.rel (0) target = $region9
  $region8: #{_lambda_.3} parent=0 // pred_region
    _
  $region9: #{_lambda_.3} parent=0 // pred_fallthru
    _
  // Predicated region
  $region10: #{_lambda_.3} parent=0 // pred_check
    _
  $region11: #{_lambda_.3} parent=0 // pred_check_branch
    %13 = sbr.rel (0) target = $region13
  $region12: #{_lambda_.3} parent=0 // pred_region
    _
  $region13: #{_lambda_.3} parent=0 // pred_fallthru
    _
  %v14 = vld [vmem:[%s0] sm:$0xff]
  %v15 = vld [vmem:[%s0 + $0x8] sm:$0xff]
  %v16 = vld [vmem:[%s1] sm:$0xff]
  %v17 = vld [vmem:[%s1 + $0x8] sm:$0xff]
  %v18 = vld [vmem:[%s1 + $0x10] sm:$0xff]
  %v19 = vld [vmem:[%s1 + $0x18] sm:$0xff]
  %v20 = vld [vmem:[%s2] sm:$0x1]
  %v22 = vperm.slane %v20, 0
  %vm24 = vcmask 261120
  %v26 = vsel %vm24, %v14, 0
  %v29 = vsel %vm24, %v15, 0
  %31 = vmatpush.msra.mxu0 0.0
  %32 = vmatpush.msra.mxu0 0.0
  %33 = vmatpush.msra.mxu0 0.0
  %34 = vmatpush.msra.mxu0 0.0
  %35 = vmatpush.msra.mxu0 0.0
  %36 = vmatpush.msra.mxu0 0.0
  %37 = vmatpush.msra.mxu0 0.0
  %38 = vmatpush.msra.mxu0 0.0
  %39 = vmatpush.msra.mxu0 0.0
  %40 = vmatpush.msra.mxu0 0.0
  %41 = vmatpush.msra.mxu0 0.0
  %42 = vmatpush.msra.mxu0 0.0
  %43 = vmatpush.msra.mxu0 %v19
  %44 = vmatpush.msra.mxu0 %v18
  %45 = vmatpush.msra.mxu0 %v17
  %46 = vmatpush.msra.mxu0 %v16
  %47 = vmatmul.f32.gmra.mxu0 %v26
  %v48 = vpop.f32.mrf.mxu0
  %v49 = vadd.f32 %v22, %v48
  %50 = vmatmul.f32.gmra.mxu0 %v29
  %v51 = vpop.f32.mrf.mxu0
  %v52 = vadd.f32 %v22, %v51
  %53 = vdwg.mxu0
  %vm54 = vcmask 785408
  %55 = vst.msk [vmem:[%s3] sm:$0xff] %vm54, %v49
  %56 = vst.msk [vmem:[%s3 + $0x8] sm:$0xff] %vm54, %v52
  // Predicated region
  $region14: #{_lambda_.3} parent=0 // pred_check
    _
  $region15: #{_lambda_.3} parent=0 // pred_check_branch
    %58 = sbr.rel (0) target = $region17
  $region16: #{_lambda_.3} parent=0 // pred_region
    _
  $region17: #{_lambda_.3} parent=0 // pred_fallthru
    _
  // Predicated region
  $region18: #{_lambda_.3} parent=0 // pred_check
    _
  $region19: #{_lambda_.3} parent=0 // pred_check_branch
    %60 = sbr.rel (0) target = $region21
  $region20: #{_lambda_.3} parent=0 // pred_region
    _
  $region21: #{_lambda_.3} parent=0 // pred_fallthru
    _

// kernel: _lambda_.4
$region0: #{_lambda_.4}
  #allocation0 [shape = 'u32[]', space=smem, size = 0x4, offset = 0x4, fixed_abs, tag = 'smem constant byte address 0x4 - core index']
  #allocation1 [shape = 'u32[72,128]{1,0:T(1,128)}', space=vmem, size = 0x9000, scoped, tag = 'internal scratch']
  #allocation2 [shape = 'f32[2,32]{1,0:T(2,128)}', space=vmem, size = 0x400, scoped, tag = 'scratch operand']
  %s0 = inlined_call_operand.vmem [shape: f32[8,2,96], index: 0, kind: input, shape index: {}]
  %s1 = inlined_call_operand.hbm [shape: f32[32,96], index: 1, kind: input, shape index: {}]
  %s2 = inlined_call_operand.vmem [shape: f32[1,96], index: 2, kind: input, shape index: {}]
  %s3 = inlined_call_operand.vmem [shape: f32[8,2,32], index: 3, kind: output, shape index: {}]
  %s4 = sld [smem:[#allocation0]]
  $region60: #{_lambda_.4} parent=0
    _
  %s6 = ssub.s32 1, %s4
  %s7 = scalar_select 0, %s6, %s4
  $region1: #{_lambda_.4} parent=0
    #allocation3 [shape = 'u8[16384]{0}', space=vmem, size = 0x4000, scoped, tag = 'input window, operand 1, single buffered']
    #allocation4 [shape = 's32[2]{0}', space=sflag, size = 0x8, scoped, tag = 'scoped memory for _lambda_.4']
    %8 = vsyncpa [#allocation4], 0
    loop: start=0, step=1, limit=4
    $region2: #{_lambda_.4} parent=1 // loop_pre_header
      _
    $region3: #{_lambda_.4} parent=1 // loop_header
      %s10 = sphi 0, %s14
      %p11 = scmp.ge.s32.totalorder %s10, 4
      %s20 = sphi 0, %s22
      %s23 = sphi 0, %s20
      %s24 = sphi 0, %s23
      %s40 = sphi 0, %s24
      %s44 = sphi 0, %s44
      %s46 = sphi 0, %s44
      %s47 = sphi 0, %s46
      %s61 = sphi 0, %s47
      %s65 = sphi 0, %s65
      %s67 = sphi 0, %s65
      %s68 = sphi 0, %s67
      %s82 = sphi 0, %s68
      %s88 = sphi 0, %s90
      %s91 = sphi 0, %s88
      %s92 = sphi 0, %s91
      %s108 = sphi 0, %s92
    $region4: #{_lambda_.4} parent=1 // loop_header_branch
      %13 = sbr.rel (%p11) target = $region8
    $region5: #{_lambda_.4} parent=1 // loop_body
      %s15 = ssub.s32 %s10, 1
      %s16 = ssub.s32 %s10, 2
      %s17 = sadd.s32 %s10, 1
      %s18 = ssub.s32 %s10, %s17
      %p19 = scmp.eq.s32.totalorder %s18, 0
      %s21 = sadd.s32 %s20, 1
      %s22 = scalar_select %p19, %s20, %s21
      %p25 = pneg %p19
      %p26 = scmp.eq.s32.totalorder %s10, 1
      %p27 = por %p25, %p26
      %p28 = scmp.ne.s32.totalorder %s20, %s23
      %p29 = scmp.eq.s32.totalorder %s10, 0
      %p30 = por %p28, %p29
      %p31 = scmp.ne.s32.totalorder %s20, %s23
      %p32 = scmp.eq.s32.totalorder %s15, 1
      %p33 = por %p31, %p32
      %p34 = scmp.ne.s32.totalorder %s23, %s24
      %p35 = scmp.eq.s32.totalorder %s15, 0
      %p36 = por %p34, %p35
      %p37 = scmp.ne.s32.totalorder %s23, %s24
      %p38 = scmp.eq.s32.totalorder %s16, 1
      %p39 = por %p37, %p38
      %p41 = scmp.ne.s32.totalorder %s24, %s40
      %p42 = scmp.eq.s32.totalorder %s16, 0
      %p43 = por %p41, %p42
      %s45 = sadd.s32 %s44, 1
      %p48 = scmp.eq.s32.totalorder %s10, 1
      %p49 = scmp.ne.s32.totalorder %s44, %s46
      %p50 = scmp.eq.s32.totalorder %s10, 0
      %p51 = por %p49, %p50
      %p52 = scmp.ne.s32.totalorder %s44, %s46
      %p53 = scmp.eq.s32.totalorder %s15, 1
      %p54 = por %p52, %p53
      %p55 = scmp.ne.s32.totalorder %s46, %s47
      %p56 = scmp.eq.s32.totalorder %s15, 0
      %p57 = por %p55, %p56
      %p58 = scmp.ne.s32.totalorder %s46, %s47
      %p59 = scmp.eq.s32.totalorder %s16, 1
      %p60 = por %p58, %p59
      %p62 = scmp.ne.s32.totalorder %s47, %s61
      %p63 = scmp.eq.s32.totalorder %s16, 0
      %p64 = por %p62, %p63
      %s66 = sadd.s32 %s65, 1
      %p69 = scmp.eq.s32.totalorder %s10, 1
      %p70 = scmp.ne.s32.totalorder %s65, %s67
      %p71 = scmp.eq.s32.totalorder %s10, 0
      %p72 = por %p70, %p71
      %p73 = scmp.ne.s32.totalorder %s65, %s67
      %p74 = scmp.eq.s32.totalorder %s15, 1
      %p75 = por %p73, %p74
      %p76 = scmp.ne.s32.totalorder %s67, %s68
      %p77 = scmp.eq.s32.totalorder %s15, 0
      %p78 = por %p76, %p77
      %p79 = scmp.ne.s32.totalorder %s67, %s68
      %p80 = scmp.eq.s32.totalorder %s16, 1
      %p81 = por %p79, %p80
      %p83 = scmp.ne.s32.totalorder %s68, %s82
      %p84 = scmp.eq.s32.totalorder %s16, 0
      %p85 = por %p83, %p84
      %s86 = ssub.s32 %s10, %s17
      %p87 = scmp.eq.s32.totalorder %s86, 0
      %s89 = sadd.s32 %s88, 1
      %s90 = scalar_select %p87, %s88, %s89
      %p93 = pneg %p87
      %p94 = scmp.eq.s32.totalorder %s10, 1
      %p95 = por %p93, %p94
      %p96 = scmp.ne.s32.totalorder %s88, %s91
      %p97 = scmp.eq.s32.totalorder %s10, 0
      %p98 = por %p96, %p97
      %p99 = scmp.ne.s32.totalorder %s88, %s91
      %p100 = scmp.eq.s32.totalorder %s15, 1
      %p101 = por %p99, %p100
      %p102 = scmp.ne.s32.totalorder %s91, %s92
      %p103 = scmp.eq.s32.totalorder %s15, 0
      %p104 = por %p102, %p103
      %p105 = scmp.ne.s32.totalorder %s91, %s92
      %p106 = scmp.eq.s32.totalorder %s16, 1
      %p107 = por %p105, %p106
      %p109 = scmp.ne.s32.totalorder %s92, %s108
      %p110 = scmp.eq.s32.totalorder %s16, 0
      %p111 = por %p109, %p110
      %p112 = scmp.le.s32.totalorder 1, %s10
      %p113 = scmp.lt.s32.totalorder %s10, 3
      %p114 = pnand %p112, %p113
      %p115 = pneg %p114
      // Predicated region
      $region9: #{_lambda_.4} parent=5 // pred_check
        _
      $region10: #{_lambda_.4} parent=5 // pred_check_branch
        %117 = sbr.rel (%p114) target = $region12
      $region11: #{_lambda_.4} parent=5 // pred_region
        %s118 = ssub.s32 %s10, 1
        // Predicated region
        $region13: #{_lambda_.4} parent=11 // pred_check
          %p119 = pneg %p57
        $region14: #{_lambda_.4} parent=11 // pred_check_branch
          %121 = sbr.rel (%p119) target = $region16
        $region15: #{_lambda_.4} parent=11 // pred_region
          %123 = vsyncadd [#allocation4], 0
          %s124 = sshll.u32 %s1, 4
          %s125 = int_to_ptr.hbm [resolvable:$true] %s124
          %s126 = sshll.u32 [#allocation3], 4
          %s127 = int_to_ptr.vmem [resolvable:$true] %s126
          %132 = dma.hbm_to_vmem [thread:$0]  %s125, 512, %s127, [#allocation4], 128, 128, 8
        $region16: #{_lambda_.4} parent=11 // pred_fallthru
          _
        // Predicated region
        $region17: #{_lambda_.4} parent=11 // pred_check
          %p133 = pneg %p78
        $region18: #{_lambda_.4} parent=11 // pred_check_branch
          %135 = sbr.rel (%p133) target = $region20
        $region19: #{_lambda_.4} parent=11 // pred_region
          _
        $region20: #{_lambda_.4} parent=11 // pred_fallthru
          _
      $region12: #{_lambda_.4} parent=5 // pred_fallthru
        _
      %p136 = scmp.lt.s32.totalorder %s10, 2
      // Predicated region
      $region21: #{_lambda_.4} parent=5 // pred_check
        %p137 = pneg %p136
      $region22: #{_lambda_.4} parent=5 // pred_check_branch
        %139 = sbr.rel (%p137) target = $region24
      $region23: #{_lambda_.4} parent=5 // pred_region
        // Predicated region
        $region25: #{_lambda_.4} parent=23 // pred_check
          %p140 = pneg %p30
        $region26: #{_lambda_.4} parent=23 // pred_check_branch
          %142 = sbr.rel (%p140) target = $region28
        $region27: #{_lambda_.4} parent=23 // pred_region
          %s143 = smul.u32 4, %s10
          %p144 = scmp.lt.s32.totalorder %s143, 7
          %s145 = scalar_select %p144, %s143, 7
          %s146 = smul.addr %s145, 2
          %s147 = scalar_lea.vmem %s0, %s146
          %s148 = smul.u32 4, %s10
        $region28: #{_lambda_.4} parent=23 // pred_fallthru
          _
      $region24: #{_lambda_.4} parent=5 // pred_fallthru
        _
      %p149 = scmp.le.s32.totalorder 1, %s10
      %p150 = scmp.lt.s32.totalorder %s10, 3
      %p151 = pnand %p149, %p150
      %p152 = pneg %p151
      // Predicated region
      $region29: #{_lambda_.4} parent=5 // pred_check
        _
      $region30: #{_lambda_.4} parent=5 // pred_check_branch
        %154 = sbr.rel (%p151) target = $region32
      $region31: #{_lambda_.4} parent=5 // pred_region
        %s155 = ssub.s32 %s10, 1
        // Predicated region
        $region33: #{_lambda_.4} parent=31 // pred_check
          %p156 = pneg %p57
        $region34: #{_lambda_.4} parent=31 // pred_check_branch
          %158 = sbr.rel (%p156) target = $region36
        $region35: #{_lambda_.4} parent=31 // pred_region
          %160 = dma.done [#allocation4], 512
        $region36: #{_lambda_.4} parent=31 // pred_fallthru
          _
        %s161 = smul.u32 4, %s15
        %p162 = scmp.lt.s32.totalorder %s161, 7
        %s163 = scalar_select %p162, %s161, 7
        %s164 = smul.addr %s163, 2
        %s165 = scalar_lea.vmem %s0, %s164
        %p166 = pneg %p36
        %p167 = pneg %p33
        %p168 = pneg %p57
        %p169 = pneg %p54
        %p170 = pneg %p78
        %p171 = pneg %p75
        %p172 = pneg %p104
        %p173 = pneg %p101
        %s174 = smul.u32 4, %s15
        %p175 = scmp.lt.s32.totalorder %s174, 7
        %s176 = scalar_select %p175, %s174, 7
        %s177 = smul.addr %s176, 2
        %s178 = scalar_lea.vmem %s3, %s177
        %s179 = smul.u32 4, %s15
        %p180 = scmp.lt.s32.totalorder %s179, 7
        %s181 = scalar_select %p180, %s179, 7
        %s182 = smul.addr %s181, 2
        %s183 = scalar_lea.vmem %s0, %s182
        %s184 = smul.u32 4, %s15
        %s185 = smul.u32 4, %s15
        %p186 = scmp.lt.s32.totalorder %s185, 7
        %s187 = scalar_select %p186, %s185, 7
        %s188 = smul.addr %s187, 2
        %s189 = scalar_lea.vmem %s3, %s188
        %s190 = smul.u32 4, %s15
        %p191 = scmp.eq.s32.totalorder %s15, 0
        // Predicated region
        $region37: #{_lambda_.4} parent=31 // pred_check
          %p192 = pneg %p191
        $region38: #{_lambda_.4} parent=31 // pred_check_branch
          %194 = sbr.rel (%p192) target = $region40
        $region39: #{_lambda_.4} parent=31 // pred_region
          %vm195 = vcmask 254976
          %196 = vst.msk [vmem:[#allocation2] sm:$0x3] %vm195, 0.0
        $region40: #{_lambda_.4} parent=31 // pred_fallthru
          _
        %v197 = vld [vmem:[#allocation3] sm:$0xff]
        %v198 = vld [vmem:[#allocation3 + $0x8] sm:$0xff]
        %v199 = vld [vmem:[#allocation3 + $0x10] sm:$0xff]
        %v200 = vld [vmem:[#allocation3 + $0x18] sm:$0xff]
        %v201 = vld [vmem:[%s2] sm:$0x1]
        %v202 = vld [vmem:[#allocation2] sm:$0x3]
        loop: start=0, step=1, limit=4
        $region41: #{_lambda_.4} parent=31 // loop_pre_header
          _
        $region42: #{_lambda_.4} parent=31 // loop_header
          %s204 = sphi 0, %s208
          %p205 = scmp.ge.s32.totalorder %s204, 4
          %v209 = vphi %v202, %v284
        $region43: #{_lambda_.4} parent=31 // loop_header_branch
          %207 = sbr.rel (%p205) target = $region47
        $region44: #{_lambda_.4} parent=31 // loop_body
          %s210 = smul.u32 %s204, 2
          %s211 = scalar_lea.vmem %s183, %s210
          %v212 = vld [vmem:[%s211] sm:$0x3]
          %v214 = vperm.slane %v201, 0
          %vm216 = vcmask 261120
          %v218 = vsel %vm216, %v209, 0
          %220 = vmatpush.msra.mxu0 0.0
          %221 = vmatpush.msra.mxu0 0.0
          %222 = vmatpush.msra.mxu0 0.0
          %223 = vmatpush.msra.mxu0 0.0
          %224 = vmatpush.msra.mxu0 0.0
          %225 = vmatpush.msra.mxu0 0.0
          %226 = vmatpush.msra.mxu0 0.0
          %227 = vmatpush.msra.mxu0 0.0
          %228 = vmatpush.msra.mxu0 0.0
          %229 = vmatpush.msra.mxu0 0.0
          %230 = vmatpush.msra.mxu0 0.0
          %231 = vmatpush.msra.mxu0 0.0
          %232 = vmatpush.msra.mxu0 %v200
          %233 = vmatpush.msra.mxu0 %v199
          %234 = vmatpush.msra.mxu0 %v198
          %235 = vmatpush.msra.mxu0 %v197
          %236 = vmatmul.f32.gmra.mxu0 %v218
          %v237 = vpop.f32.mrf.mxu0
          %v238 = vadd.f32 %v214, %v237
          %239 = vdwg.mxu0
          %v240 = vadd.f32 %v212, %v238
          %v241 = vxor.u32 %v240, 2147483648
          %v242 = vmul.f32 %v241, 1.442695
          %v243 = vpow.pop %v242
          %v244 = vadd.f32 %v243, 1.0
          %v245 = vrcp.pop %v244
          %v246 = vmul.f32 %v244, %v245
          %v247 = vsub.f32 1.0, %v246
          %v248 = vmul.f32 %v245, %v247
          %v249 = vadd.f32 %v245, %v248
          %vm250 = vweird.f32 %v244
          %vm251 = vweird.f32 %v245
          %vm252 = vmor %vm250, %vm251
          %v253 = vsel %vm252, %v245, %v249
          %v254 = vand.u32 2147483647, %v244
          %vm255 = vcmp.eq.f32.partialorder %v254, 8.507059e+37
          %v256 = vand.u32 %v244, 2147483648
          %v257 = vor.u32 1.1754944e-38, %v256
          %v258 = vsel %vm255, %v257, %v253
          %v259 = vmul.f32 1.0, %v258
          %261 = vrot.lane.b32.xlu0 %v238, 64
          %v262 = vpop.permute.xlu0 %261
          %v264 = vmul.f32 %v259, %v262
          %266 = vrot.lane.b32.xlu0 %v264, 64
          %v267 = vpop.permute.xlu0 %266
          %v269 = vadd.f32 %v212, %v267
          %v270 = vtanh.pop %v269
          %v271 = vsub.f32 1.0, %v259
          %273 = vrot.lane.b32.xlu0 %v270, 96
          %v274 = vpop.permute.xlu0 %273
          %v276 = vmul.f32 %v271, %v274
          %277 = vrot.lane.b32.xlu0 %v209, 32
          %v278 = vpop.permute.xlu0 %277
          %v280 = vmul.f32 %v259, %v278
          %v281 = vadd.f32 %v276, %v280
          %283 = vrot.lane.b32.xlu0 %v281, 96
          %v284 = vpop.permute.xlu0 %283
          %s286 = scalar_lea.vmem %s189, %s210
          %vm287 = vcmask 254976
          %288 = vst.msk [vmem:[%s286] sm:$0x3] %vm287, %v284
        $region45: #{_lambda_.4} parent=31 // loop_footer
          %s208 = sadd.s32 1, %s204
        $region46: #{_lambda_.4} parent=31 // loop_footer_branch
          %203 = sbr.rel target = $region42
        $region47: #{_lambda_.4} parent=31 // loop_exit
          _
        %vm289 = vcmask 254976
        %290 = vst.msk [vmem:[#allocation2] sm:$0x3] %vm289, %v209
        %s291 = smul.u32 4, %s15
        %p292 = scmp.lt.s32.totalorder %s291, 7
        %s293 = scalar_select %p292, %s291, 7
        %s294 = smul.addr %s293, 2
        %s295 = scalar_lea.vmem %s3, %s294
        // Predicated region
        $region48: #{_lambda_.4} parent=31 // pred_check
          %p296 = pneg %p101
        $region49: #{_lambda_.4} parent=31 // pred_check_branch
          %298 = sbr.rel (%p296) target = $region51
        $region50: #{_lambda_.4} parent=31 // pred_region
          %s299 = smul.u32 4, %s15
        $region51: #{_lambda_.4} parent=31 // pred_fallthru
          _
      $region32: #{_lambda_.4} parent=5 // pred_fallthru
        _
      %p300 = scmp.le.s32.totalorder 2, %s10
      // Predicated region
      $region52: #{_lambda_.4} parent=5 // pred_check
        %p301 = pneg %p300
      $region53: #{_lambda_.4} parent=5 // pred_check_branch
        %303 = sbr.rel (%p301) target = $region55
      $region54: #{_lambda_.4} parent=5 // pred_region
        %s304 = ssub.s32 %s10, 2
        // Predicated region
        $region56: #{_lambda_.4} parent=54 // pred_check
          %p305 = pneg %p107
        $region57: #{_lambda_.4} parent=54 // pred_check_branch
          %307 = sbr.rel (%p305) target = $region59
        $region58: #{_lambda_.4} parent=54 // pred_region
          %s308 = smul.u32 4, %s16
          %p309 = scmp.lt.s32.totalorder %s308, 7
          %s310 = scalar_select %p309, %s308, 7
          %s311 = smul.addr %s310, 2
          %s312 = scalar_lea.vmem %s3, %s311
        $region59: #{_lambda_.4} parent=54 // pred_fallthru
          _
      $region55: #{_lambda_.4} parent=5 // pred_fallthru
        _
    $region6: #{_lambda_.4} parent=1 // loop_footer
      %s14 = sadd.s32 1, %s10
    $region7: #{_lambda_.4} parent=1 // loop_footer_branch
      %9 = sbr.rel target = $region3
    $region8: #{_lambda_.4} parent=1 // loop_exit
      _
    %313 = vsyncpa [#allocation4], 1
    %s314 = scalar_lea.sflag [#allocation4], 1
    %315 = vsyncpa %s314, 1

// kernel: _lambda_.5
$region0: #{_lambda_.5}
  #allocation0 [shape = 'u32[]', space=smem, size = 0x4, offset = 0x4, fixed_abs, tag = 'smem constant byte address 0x4 - core index']
  #allocation1 [shape = 'u32[72,128]{1,0:T(1,128)}', space=vmem, size = 0x9000, scoped, tag = 'internal scratch']
  %s0 = inlined_call_operand.vmem [shape: f32[2,12,32], index: 0, kind: input, shape index: {}]
  %s1 = inlined_call_operand.vmem [shape: f32[5,16,32], index: 1, kind: input, shape index: {}]
  %s2 = inlined_call_operand.vmem [shape: f32[2,2,16,32], index: 2, kind: input, shape index: {}]
  %s3 = inlined_call_operand.vmem [shape: f32[2,2,16,32], index: 3, kind: input, shape index: {}]
  %s4 = inlined_call_operand.vmem [shape: f32[2,8,16,32], index: 4, kind: output, shape index: {}]
  %s5 = sld [smem:[#allocation0]]
  $region57: #{_lambda_.5} parent=0
    _
  %s7 = ssub.s32 1, %s5
  %s8 = scalar_select 0, %s7, %s5
  loop: start=0, step=1, limit=6
  $region2: #{_lambda_.5} parent=0 // loop_pre_header
    _
  $region3: #{_lambda_.5} parent=0 // loop_header
    %s10 = sphi 0, %s14
    %p11 = scmp.ge.s32.totalorder %s10, 6
    %s17 = sphi 0, %s29
    %s18 = sphi 0, %s25
    %s19 = sphi 0, %s17
    %s20 = sphi 0, %s18
    %s21 = sphi 0, %s19
    %s22 = sphi 0, %s20
    %s32 = sphi 0, %s34
    %s35 = sphi 0, %s32
    %s36 = sphi 0, %s35
    %s52 = sphi 0, %s36
    %s56 = sphi 0, %s56
    %s58 = sphi 0, %s56
    %s59 = sphi 0, %s58
    %s73 = sphi 0, %s59
    %s79 = sphi 0, %s81
    %s82 = sphi 0, %s79
    %s83 = sphi 0, %s82
    %s99 = sphi 0, %s83
    %s105 = sphi 0, %s107
    %s108 = sphi 0, %s105
    %s109 = sphi 0, %s108
    %s125 = sphi 0, %s109
    %s133 = sphi 0, %s135
    %s136 = sphi 0, %s133
    %s137 = sphi 0, %s136
    %s153 = sphi 0, %s137
  $region4: #{_lambda_.5} parent=0 // loop_header_branch
    %13 = sbr.rel (%p11) target = $region8
  $region5: #{_lambda_.5} parent=0 // loop_body
    %s15 = ssub.s32 %s10, 1
    %s16 = ssub.s32 %s10, 2
    %s23 = sadd.s32 1, %s18
    %p24 = scmp.ge.s32.totalorder %s23, 2
    %s25 = scalar_select %p24, 0, %s23
    %s26 = sadd.s32 1, %s17
    %s27 = scalar_select %p24, %s26, %s17
    %p28 = scmp.ge.s32.totalorder %s27, 2
    %s29 = scalar_select %p28, 0, %s27
    %s30 = ssub.s32 %s17, %s29
    %p31 = scmp.eq.s32.totalorder %s30, 0
    %s33 = sadd.s32 %s32, 1
    %s34 = scalar_select %p31, %s32, %s33
    %p37 = pneg %p31
    %p38 = scmp.eq.s32.totalorder %s10, 3
    %p39 = por %p37, %p38
    %p40 = scmp.ne.s32.totalorder %s32, %s35
    %p41 = scmp.eq.s32.totalorder %s10, 0
    %p42 = por %p40, %p41
    %p43 = scmp.ne.s32.totalorder %s32, %s35
    %p44 = scmp.eq.s32.totalorder %s15, 3
    %p45 = por %p43, %p44
    %p46 = scmp.ne.s32.totalorder %s35, %s36
    %p47 = scmp.eq.s32.totalorder %s15, 0
    %p48 = por %p46, %p47
    %p49 = scmp.ne.s32.totalorder %s35, %s36
    %p50 = scmp.eq.s32.totalorder %s16, 3
    %p51 = por %p49, %p50
    %p53 = scmp.ne.s32.totalorder %s36, %s52
    %p54 = scmp.eq.s32.totalorder %s16, 0
    %p55 = por %p53, %p54
    %s57 = sadd.s32 %s56, 1
    %p60 = scmp.eq.s32.totalorder %s10, 3
    %p61 = scmp.ne.s32.totalorder %s56, %s58
    %p62 = scmp.eq.s32.totalorder %s10, 0
    %p63 = por %p61, %p62
    %p64 = scmp.ne.s32.totalorder %s56, %s58
    %p65 = scmp.eq.s32.totalorder %s15, 3
    %p66 = por %p64, %p65
    %p67 = scmp.ne.s32.totalorder %s58, %s59
    %p68 = scmp.eq.s32.totalorder %s15, 0
    %p69 = por %p67, %p68
    %p70 = scmp.ne.s32.totalorder %s58, %s59
    %p71 = scmp.eq.s32.totalorder %s16, 3
    %p72 = por %p70, %p71
    %p74 = scmp.ne.s32.totalorder %s59, %s73
    %p75 = scmp.eq.s32.totalorder %s16, 0
    %p76 = por %p74, %p75
    %s77 = ssub.s32 %s17, %s29
    %p78 = scmp.eq.s32.totalorder %s77, 0
    %s80 = sadd.s32 %s79, 1
    %s81 = scalar_select %p78, %s79, %s80
    %p84 = pneg %p78
    %p85 = scmp.eq.s32.totalorder %s10, 3
    %p86 = por %p84, %p85
    %p87 = scmp.ne.s32.totalorder %s79, %s82
    %p88 = scmp.eq.s32.totalorder %s10, 0
    %p89 = por %p87, %p88
    %p90 = scmp.ne.s32.totalorder %s79, %s82
    %p91 = scmp.eq.s32.totalorder %s15, 3
    %p92 = por %p90, %p91
    %p93 = scmp.ne.s32.totalorder %s82, %s83
    %p94 = scmp.eq.s32.totalorder %s15, 0
    %p95 = por %p93, %p94
    %p96 = scmp.ne.s32.totalorder %s82, %s83
    %p97 = scmp.eq.s32.totalorder %s16, 3
    %p98 = por %p96, %p97
    %p100 = scmp.ne.s32.totalorder %s83, %s99
    %p101 = scmp.eq.s32.totalorder %s16, 0
    %p102 = por %p100, %p101
    %s103 = ssub.s32 %s17, %s29
    %p104 = scmp.eq.s32.totalorder %s103, 0
    %s106 = sadd.s32 %s105, 1
    %s107 = scalar_select %p104, %s105, %s106
    %p110 = pneg %p104
    %p111 = scmp.eq.s32.totalorder %s10, 3
    %p112 = por %p110, %p111
    %p113 = scmp.ne.s32.totalorder %s105, %s108
    %p114 = scmp.eq.s32.totalorder %s10, 0
    %p115 = por %p113, %p114
    %p116 = scmp.ne.s32.totalorder %s105, %s108
    %p117 = scmp.eq.s32.totalorder %s15, 3
    %p118 = por %p116, %p117
    %p119 = scmp.ne.s32.totalorder %s108, %s109
    %p120 = scmp.eq.s32.totalorder %s15, 0
    %p121 = por %p119, %p120
    %p122 = scmp.ne.s32.totalorder %s108, %s109
    %p123 = scmp.eq.s32.totalorder %s16, 3
    %p124 = por %p122, %p123
    %p126 = scmp.ne.s32.totalorder %s109, %s125
    %p127 = scmp.eq.s32.totalorder %s16, 0
    %p128 = por %p126, %p127
    %s129 = ssub.s32 %s17, %s29
    %s130 = ssub.s32 %s18, %s25
    %s131 = sor.u32 %s129, %s130
    %p132 = scmp.eq.s32.totalorder %s131, 0
    %s134 = sadd.s32 %s133, 1
    %s135 = scalar_select %p132, %s133, %s134
    %p138 = pneg %p132
    %p139 = scmp.eq.s32.totalorder %s10, 3
    %p140 = por %p138, %p139
    %p141 = scmp.ne.s32.totalorder %s133, %s136
    %p142 = scmp.eq.s32.totalorder %s10, 0
    %p143 = por %p141, %p142
    %p144 = scmp.ne.s32.totalorder %s133, %s136
    %p145 = scmp.eq.s32.totalorder %s15, 3
    %p146 = por %p144, %p145
    %p147 = scmp.ne.s32.totalorder %s136, %s137
    %p148 = scmp.eq.s32.totalorder %s15, 0
    %p149 = por %p147, %p148
    %p150 = scmp.ne.s32.totalorder %s136, %s137
    %p151 = scmp.eq.s32.totalorder %s16, 3
    %p152 = por %p150, %p151
    %p154 = scmp.ne.s32.totalorder %s137, %s153
    %p155 = scmp.eq.s32.totalorder %s16, 0
    %p156 = por %p154, %p155
    %p157 = scmp.le.s32.totalorder 1, %s10
    %p158 = scmp.lt.s32.totalorder %s10, 5
    %p159 = pnand %p157, %p158
    %p160 = pneg %p159
    // Predicated region
    $region9: #{_lambda_.5} parent=5 // pred_check
      _
    $region10: #{_lambda_.5} parent=5 // pred_check_branch
      %162 = sbr.rel (%p159) target = $region12
    $region11: #{_lambda_.5} parent=5 // pred_region
      %s163 = ssub.s32 %s10, 1
      // Predicated region
      $region13: #{_lambda_.5} parent=11 // pred_check
        %p164 = pneg %p69
      $region14: #{_lambda_.5} parent=11 // pred_check_branch
        %166 = sbr.rel (%p164) target = $region16
      $region15: #{_lambda_.5} parent=11 // pred_region
        _
      $region16: #{_lambda_.5} parent=11 // pred_fallthru
        _
    $region12: #{_lambda_.5} parent=5 // pred_fallthru
      _
    %p167 = scmp.lt.s32.totalorder %s10, 4
    // Predicated region
    $region17: #{_lambda_.5} parent=5 // pred_check
      %p168 = pneg %p167
    $region18: #{_lambda_.5} parent=5 // pred_check_branch
      %170 = sbr.rel (%p168) target = $region20
    $region19: #{_lambda_.5} parent=5 // pred_region
      // Predicated region
      $region21: #{_lambda_.5} parent=19 // pred_check
        %p171 = pneg %p42
      $region22: #{_lambda_.5} parent=19 // pred_check_branch
        %173 = sbr.rel (%p171) target = $region24
      $region23: #{_lambda_.5} parent=19 // pred_region
        %p174 = scmp.lt.s32.totalorder %s17, 1
        %s175 = scalar_select %p174, %s17, 1
        %s176 = smul.addr %s175, 2
        %s177 = smul.addr %s176, 8
        %s178 = scalar_lea.vmem %s0, %s177
      $region24: #{_lambda_.5} parent=19 // pred_fallthru
        _
      // Predicated region
      $region25: #{_lambda_.5} parent=19 // pred_check
        %p179 = pneg %p89
      $region26: #{_lambda_.5} parent=19 // pred_check_branch
        %181 = sbr.rel (%p179) target = $region28
      $region27: #{_lambda_.5} parent=19 // pred_region
        %p182 = scmp.lt.s32.totalorder %s17, 1
        %s183 = scalar_select %p182, %s17, 1
        %s184 = smul.addr %s183, 4
        %s185 = smul.addr %s184, 8
        %s186 = scalar_lea.vmem %s2, %s185
      $region28: #{_lambda_.5} parent=19 // pred_fallthru
        _
      // Predicated region
      $region29: #{_lambda_.5} parent=19 // pred_check
        %p187 = pneg %p115
      $region30: #{_lambda_.5} parent=19 // pred_check_branch
        %189 = sbr.rel (%p187) target = $region32
      $region31: #{_lambda_.5} parent=19 // pred_region
        %p190 = scmp.lt.s32.totalorder %s17, 1
        %s191 = scalar_select %p190, %s17, 1
        %s192 = smul.addr %s191, 4
        %s193 = smul.addr %s192, 8
        %s194 = scalar_lea.vmem %s3, %s193
      $region32: #{_lambda_.5} parent=19 // pred_fallthru
        _
    $region20: #{_lambda_.5} parent=5 // pred_fallthru
      _
    %p195 = scmp.le.s32.totalorder 1, %s10
    %p196 = scmp.lt.s32.totalorder %s10, 5
    %p197 = pnand %p195, %p196
    %p198 = pneg %p197
    // Predicated region
    $region33: #{_lambda_.5} parent=5 // pred_check
      _
    $region34: #{_lambda_.5} parent=5 // pred_check_branch
      %200 = sbr.rel (%p197) target = $region36
    $region35: #{_lambda_.5} parent=5 // pred_region
      %s201 = ssub.s32 %s10, 1
      %p202 = scmp.lt.s32.totalorder %s19, 1
      %s203 = scalar_select %p202, %s19, 1
      %s204 = smul.addr %s203, 2
      %s205 = smul.addr %s204, 8
      %s206 = scalar_lea.vmem %s0, %s205
      %p207 = pneg %p48
      %p208 = pneg %p45
      %p209 = pneg %p69
      %p210 = pneg %p66
      %p211 = scmp.lt.s32.totalorder %s19, 1
      %s212 = scalar_select %p211, %s19, 1
      %s213 = smul.addr %s212, 4
      %s214 = smul.addr %s213, 8
      %s215 = scalar_lea.vmem %s2, %s214
      %p216 = pneg %p95
      %p217 = pneg %p92
      %p218 = scmp.lt.s32.totalorder %s19, 1
      %s219 = scalar_select %p218, %s19, 1
      %s220 = smul.addr %s219, 4
      %s221 = smul.addr %s220, 8
      %s222 = scalar_lea.vmem %s3, %s221
      %p223 = pneg %p121
      %p224 = pneg %p118
      %p225 = pneg %p149
      %p226 = pneg %p146
      %s227 = smul.u32 4, %s20
      %p228 = scmp.lt.s32.totalorder %s19, 1
      %s229 = scalar_select %p228, %s19, 1
      %p230 = scmp.lt.s32.totalorder %s227, 7
      %s231 = scalar_select %p230, %s227, 7
      %s232 = smul.addr %s231, 2
      %s233 = smul.addr %s229, 16
      %s234 = sadd.s32 %s232, %s233
      %s235 = smul.addr %s234, 8
      %s236 = scalar_lea.vmem %s4, %s235
      %p237 = scmp.lt.s32.totalorder %s19, 1
      %s238 = scalar_select %p237, %s19, 1
      %s239 = smul.addr %s238, 2
      %s240 = smul.addr %s239, 8
      %s241 = scalar_lea.vmem %s0, %s240
      %p242 = scmp.lt.s32.totalorder %s19, 1
      %s243 = scalar_select %p242, %s19, 1
      %s244 = smul.addr %s243, 4
      %s245 = smul.addr %s244, 8
      %s246 = scalar_lea.vmem %s2, %s245
      %p247 = scmp.lt.s32.totalorder %s19, 1
      %s248 = scalar_select %p247, %s19, 1
      %s249 = smul.addr %s248, 4
      %s250 = smul.addr %s249, 8
      %s251 = scalar_lea.vmem %s3, %s250
      %s252 = smul.u32 4, %s20
      %p253 = scmp.lt.s32.totalorder %s19, 1
      %s254 = scalar_select %p253, %s19, 1
      %p255 = scmp.lt.s32.totalorder %s252, 7
      %s256 = scalar_select %p255, %s252, 7
      %s257 = smul.addr %s256, 2
      %s258 = smul.addr %s254, 16
      %s259 = sadd.s32 %s257, %s258
      %s260 = smul.addr %s259, 8
      %s261 = scalar_lea.vmem %s4, %s260
      %s262 = smul.u32 4, %s20
      %s263 = smul.u32 %s20, 4
      %s264 = scalar_lea.vmem %s241, %s263
      %v265 = vld [vmem:[%s264] sm:$0xf]
      %v267 = vrot.slane %v265, 1
      %v268 = vrot.slane %v265, 2
      %v269 = vrot.slane %v265, 3
      %v270 = vld [vmem:[%s1] sm:$0xff]
      %v271 = vld [vmem:[%s1 + $0x8] sm:$0xff]
      %v272 = vperm.slane %v265, 0
      %v273 = vperm.slane %v267, 0
      %v274 = vperm.slane %v268, 0
      %v275 = vperm.slane %v269, 0
      %v280 = vmul.f32 %v272, %v270
      %v281 = vmul.f32 %v272, %v271
      %v282 = vmul.f32 %v273, %v270
      %v283 = vmul.f32 %v273, %v271
      %v284 = vmul.f32 %v274, %v270
      %v285 = vmul.f32 %v274, %v271
      %v286 = vmul.f32 %v275, %v270
      %v287 = vmul.f32 %v275, %v271
      %s288 = sadd.s32 %s263, 1
      %s289 = scalar_lea.vmem %s241, %s288
      %v290 = vld [vmem:[%s289] sm:$0xf]
      %v292 = vrot.slane %v290, 1
      %v293 = vrot.slane %v290, 2
      %v294 = vrot.slane %v290, 3
      %s295 = scalar_lea.vmem %s1, 16
      %v296 = vld [vmem:[%s295] sm:$0xff]
      %v297 = vld [vmem:[%s295 + $0x8] sm:$0xff]
      %v298 = vperm.slane %v290, 0
      %v299 = vperm.slane %v292, 0
      %v300 = vperm.slane %v293, 0
      %v301 = vperm.slane %v294, 0
      %v306 = vmul.f32 %v298, %v296
      %v307 = vmul.f32 %v298, %v297
      %v308 = vmul.f32 %v299, %v296
      %v309 = vmul.f32 %v299, %v297
      %v310 = vmul.f32 %v300, %v296
      %v311 = vmul.f32 %v300, %v297
      %v312 = vmul.f32 %v301, %v296
      %v313 = vmul.f32 %v301, %v297
      %v314 = vadd.f32 %v280, %v306
      %v315 = vadd.f32 %v281, %v307
      %v316 = vadd.f32 %v282, %v308
      %v317 = vadd.f32 %v283, %v309
      %v318 = vadd.f32 %v284, %v310
      %v319 = vadd.f32 %v285, %v311
      %v320 = vadd.f32 %v286, %v312
      %v321 = vadd.f32 %v287, %v313
      %s322 = sadd.s32 %s263, 2
      %s323 = scalar_lea.vmem %s241, %s322
      %v324 = vld [vmem:[%s323] sm:$0xf]
      %v326 = vrot.slane %v324, 1
      %v327 = vrot.slane %v324, 2
      %v328 = vrot.slane %v324, 3
      %s329 = scalar_lea.vmem %s1, 32
      %v330 = vld [vmem:[%s329] sm:$0xff]
      %v331 = vld [vmem:[%s329 + $0x8] sm:$0xff]
      %v332 = vperm.slane %v324, 0
      %v333 = vperm.slane %v326, 0
      %v334 = vperm.slane %v327, 0
      %v335 = vperm.slane %v328, 0
      %v340 = vmul.f32 %v332, %v330
      %v341 = vmul.f32 %v332, %v331
      %v342 = vmul.f32 %v333, %v330
      %v343 = vmul.f32 %v333, %v331
      %v344 = vmul.f32 %v334, %v330
      %v345 = vmul.f32 %v334, %v331
      %v346 = vmul.f32 %v335, %v330
      %v347 = vmul.f32 %v335, %v331
      %v348 = vadd.f32 %v314, %v340
      %v349 = vadd.f32 %v315, %v341
      %v350 = vadd.f32 %v316, %v342
      %v351 = vadd.f32 %v317, %v343
      %v352 = vadd.f32 %v318, %v344
      %v353 = vadd.f32 %v319, %v345
      %v354 = vadd.f32 %v320, %v346
      %v355 = vadd.f32 %v321, %v347
      %s356 = sadd.s32 %s263, 3
      %s357 = scalar_lea.vmem %s241, %s356
      %v358 = vld [vmem:[%s357] sm:$0xf]
      %v360 = vrot.slane %v358, 1
      %v361 = vrot.slane %v358, 2
      %v362 = vrot.slane %v358, 3
      %s363 = scalar_lea.vmem %s1, 48
      %v364 = vld [vmem:[%s363] sm:$0xff]
      %v365 = vld [vmem:[%s363 + $0x8] sm:$0xff]
      %v366 = vperm.slane %v358, 0
      %v367 = vperm.slane %v360, 0
      %v368 = vperm.slane %v361, 0
      %v369 = vperm.slane %v362, 0
      %v374 = vmul.f32 %v366, %v364
      %v375 = vmul.f32 %v366, %v365
      %v376 = vmul.f32 %v367, %v364
      %v377 = vmul.f32 %v367, %v365
      %v378 = vmul.f32 %v368, %v364
      %v379 = vmul.f32 %v368, %v365
      %v380 = vmul.f32 %v369, %v364
      %v381 = vmul.f32 %v369, %v365
      %v382 = vadd.f32 %v348, %v374
      %v383 = vadd.f32 %v349, %v375
      %v384 = vadd.f32 %v350, %v376
      %v385 = vadd.f32 %v351, %v377
      %v386 = vadd.f32 %v352, %v378
      %v387 = vadd.f32 %v353, %v379
      %v388 = vadd.f32 %v354, %v380
      %v389 = vadd.f32 %v355, %v381
      %s390 = sadd.s32 %s263, 4
      %s391 = scalar_lea.vmem %s241, %s390
      %v392 = vld [vmem:[%s391] sm:$0xf]
      %v394 = vrot.slane %v392, 1
      %v395 = vrot.slane %v392, 2
      %v396 = vrot.slane %v392, 3
      %s397 = scalar_lea.vmem %s1, 64
      %v398 = vld [vmem:[%s397] sm:$0xff]
      %v399 = vld [vmem:[%s397 + $0x8] sm:$0xff]
      %v400 = vperm.slane %v392, 0
      %v401 = vperm.slane %v394, 0
      %v402 = vperm.slane %v395, 0
      %v403 = vperm.slane %v396, 0
      %v408 = vmul.f32 %v400, %v398
      %v409 = vmul.f32 %v400, %v399
      %v410 = vmul.f32 %v401, %v398
      %v411 = vmul.f32 %v401, %v399
      %v412 = vmul.f32 %v402, %v398
      %v413 = vmul.f32 %v402, %v399
      %v414 = vmul.f32 %v403, %v398
      %v415 = vmul.f32 %v403, %v399
      %v416 = vadd.f32 %v382, %v408
      %v417 = vadd.f32 %v383, %v409
      %v418 = vadd.f32 %v384, %v410
      %v419 = vadd.f32 %v385, %v411
      %v420 = vadd.f32 %v386, %v412
      %v421 = vadd.f32 %v387, %v413
      %v422 = vadd.f32 %v388, %v414
      %v423 = vadd.f32 %v389, %v415
      %vm424 = vcmask 261120
      %425 = vst.msk [vmem:[%s261] sm:$0xff] %vm424, %v416
      %426 = vst.msk [vmem:[%s261 + $0x8] sm:$0xff] %vm424, %v417
      %427 = vst.msk [vmem:[%s261 + $0x10] sm:$0xff] %vm424, %v418
      %428 = vst.msk [vmem:[%s261 + $0x18] sm:$0xff] %vm424, %v419
      %429 = vst.msk [vmem:[%s261 + $0x20] sm:$0xff] %vm424, %v420
      %430 = vst.msk [vmem:[%s261 + $0x28] sm:$0xff] %vm424, %v421
      %431 = vst.msk [vmem:[%s261 + $0x30] sm:$0xff] %vm424, %v422
      %432 = vst.msk [vmem:[%s261 + $0x38] sm:$0xff] %vm424, %v423
      %p433 = scmp.eq.s32.totalorder %s20, 0
      // Predicated region
      $region37: #{_lambda_.5} parent=35 // pred_check
        %p434 = pneg %p433
      $region38: #{_lambda_.5} parent=35 // pred_check_branch
        %436 = sbr.rel (%p434) target = $region40
      $region39: #{_lambda_.5} parent=35 // pred_region
        %v437 = vld [vmem:[%s246] sm:$0xff]
        %v438 = vld [vmem:[%s246 + $0x8] sm:$0xff]
        %v439 = vld [vmem:[%s246 + $0x10] sm:$0xff]
        %v440 = vld [vmem:[%s246 + $0x18] sm:$0xff]
        %441 = vst.msk [vmem:[%s261] sm:$0xff] %vm424, %v437
        %442 = vst.msk [vmem:[%s261 + $0x8] sm:$0xff] %vm424, %v438
        %443 = vst.msk [vmem:[%s261 + $0x10] sm:$0xff] %vm424, %v439
        %444 = vst.msk [vmem:[%s261 + $0x18] sm:$0xff] %vm424, %v440
      $region40: #{_lambda_.5} parent=35 // pred_fallthru
        _
      %p445 = scmp.eq.s32.totalorder %s20, 1
      // Predicated region
      $region41: #{_lambda_.5} parent=35 // pred_check
        %p446 = pneg %p445
      $region42: #{_lambda_.5} parent=35 // pred_check_branch
        %448 = sbr.rel (%p446) target = $region44
      $region43: #{_lambda_.5} parent=35 // pred_region
        %v449 = vld [vmem:[%s251] sm:$0xff]
        %v450 = vld [vmem:[%s251 + $0x8] sm:$0xff]
        %v451 = vld [vmem:[%s251 + $0x10] sm:$0xff]
        %v452 = vld [vmem:[%s251 + $0x18] sm:$0xff]
        %s453 = scalar_lea.vmem %s261, 32
        %454 = vst.msk [vmem:[%s453] sm:$0xff] %vm424, %v449
        %455 = vst.msk [vmem:[%s453 + $0x8] sm:$0xff] %vm424, %v450
        %456 = vst.msk [vmem:[%s453 + $0x10] sm:$0xff] %vm424, %v451
        %457 = vst.msk [vmem:[%s453 + $0x18] sm:$0xff] %vm424, %v452
      $region44: #{_lambda_.5} parent=35 // pred_fallthru
        _
      %s458 = smul.u32 4, %s20
      %p459 = scmp.lt.s32.totalorder %s19, 1
      %s460 = scalar_select %p459, %s19, 1
      %p461 = scmp.lt.s32.totalorder %s458, 7
      %s462 = scalar_select %p461, %s458, 7
      %s463 = smul.addr %s462, 2
      %s464 = smul.addr %s460, 16
      %s465 = sadd.s32 %s463, %s464
      %s466 = smul.addr %s465, 8
      %s467 = scalar_lea.vmem %s4, %s466
      // Predicated region
      $region45: #{_lambda_.5} parent=35 // pred_check
        %p468 = pneg %p146
      $region46: #{_lambda_.5} parent=35 // pred_check_branch
        %470 = sbr.rel (%p468) target = $region48
      $region47: #{_lambda_.5} parent=35 // pred_region
        %s471 = smul.u32 4, %s20
      $region48: #{_lambda_.5} parent=35 // pred_fallthru
        _
    $region36: #{_lambda_.5} parent=5 // pred_fallthru
      _
    %p472 = scmp.le.s32.totalorder 2, %s10
    // Predicated region
    $region49: #{_lambda_.5} parent=5 // pred_check
      %p473 = pneg %p472
    $region50: #{_lambda_.5} parent=5 // pred_check_branch
      %475 = sbr.rel (%p473) target = $region52
    $region51: #{_lambda_.5} parent=5 // pred_region
      %s476 = ssub.s32 %s10, 2
      // Predicated region
      $region53: #{_lambda_.5} parent=51 // pred_check
        %p477 = pneg %p152
      $region54: #{_lambda_.5} parent=51 // pred_check_branch
        %479 = sbr.rel (%p477) target = $region56
      $region55: #{_lambda_.5} parent=51 // pred_region
        %s480 = smul.u32 4, %s22
        %p481 = scmp.lt.s32.totalorder %s21, 1
        %s482 = scalar_select %p481, %s21, 1
        %p483 = scmp.lt.s32.totalorder %s480, 7
        %s484 = scalar_select %p483, %s480, 7
        %s485 = smul.addr %s484, 2
        %s486 = smul.addr %s482, 16
        %s487 = sadd.s32 %s485, %s486
        %s488 = smul.addr %s487, 8
        %s489 = scalar_lea.vmem %s4, %s488
      $region56: #{_lambda_.5} parent=51 // pred_fallthru
        _
    $region52: #{_lambda_.5} parent=5 // pred_fallthru
      _
  $region6: #{_lambda_.5} parent=0 // loop_footer
    %s14 = sadd.s32 1, %s10
  $region7: #{_lambda_.5} parent=0 // loop_footer_branch
    %9 = sbr.rel target = $region3
  $region8: #{_lambda_.5} parent=0 // loop_exit
    _

</llo_original>
